<compile_context>
chip_gen: v6e
topology: v6e:2x2x1
jax: 0.10.0
libtpu: 0.0.40
codegen_flags: <defaults>
</compile_context>

<pallas_src>
import functools

import jax
import jax.numpy as jnp
from jax.experimental import pallas as pl
from jax.experimental.pallas import tpu as pltpu

# Deterministic "augmentation" parameters for the two views.
VIEW0_SCALE, VIEW0_SHIFT = 1.0, 0.0     # identity-ish view
VIEW1_SCALE, VIEW1_SHIFT = 0.8, 0.1     # jittered view

# TODO(synk): torchvision's random spatial augmentations (RandomResizedCrop,
# RandomHorizontalFlip, ...) have no clean deterministic Pallas equivalent and
# are replaced by the per-view per-channel affine above.


def _collate_kernel(x_ref, coef_ref, out0_ref, out1_ref):
    # x_ref:    (BB, LT) block of images laid out as [B*C, H*W]
    #           (one row = one (image, channel) plane), native input dtype.
    # coef_ref: (BB, 4)  per-row folded coefficients [a0, b0, a1, b1] (f32).
    x = x_ref[...].astype(jnp.float32)
    c = coef_ref[...]
    out0_ref[...] = (x * c[:, 0:1] + c[:, 1:2]).astype(out0_ref.dtype)
    out1_ref[...] = (x * c[:, 2:3] + c[:, 3:4]).astype(out1_ref.dtype)


def _sublane_mult(dtype):
    # Second-minor block dim must be a multiple of 8 (f32) / 16 (bf16) /
    # 32 (int8) unless it equals the full array extent.
    return max(8, 32 // jnp.dtype(dtype).itemsize)


@functools.lru_cache(maxsize=None)
def _vmem_budgets():
    """(per-block byte budget, vmem_limit_bytes), generation-gated."""
    cap = 64 * 1024 * 1024
    try:
        cap = int(getattr(pltpu.get_tpu_info(), "vmem_capacity_bytes", cap))
    except Exception:
        pass
    if cap >= 128 * 1024 * 1024:                    # v5e / v6e (128 MiB VMEM)
        return 64 * 1024 * 1024, 96 * 1024 * 1024
    return 24 * 1024 * 1024, 48 * 1024 * 1024       # v7x (64 MiB) / unknown


def _choose_tiles(rows, hw, in_dtype, out_dtype, block_budget):
    """Pick (row block, lane block) for the [rows, hw] elementwise kernel."""
    sub = max(_sublane_mult(in_dtype), _sublane_mult(out_dtype))
    # Double-buffered input + 2 double-buffered outputs, per element.
    per_elem = 2 * jnp.dtype(in_dtype).itemsize + 4 * jnp.dtype(out_dtype).itemsize

    min_rows = rows if rows <= sub else sub          # smallest layout-legal row block
    if min_rows * hw * per_elem > block_budget:
        # Even the smallest full-width row block busts the budget: tile lanes.
        lt = block_budget // max(1, min_rows * per_elem)
        lt = max(128, (lt // 128) * 128)
        return min_rows, min(lt, hw)

    bb = block_budget // max(1, hw * per_elem)
    if rows <= sub:
        return rows, hw                              # single full-extent row block
    bb = min(bb, pl.cdiv(rows, 2))                   # keep >= 2 grid steps (v7x megacore)
    bb = max(sub, (bb // sub) * sub)
    return bb, hw


@functools.partial(jax.jit, static_argnames=("out_dtype",))
def _two_view_transform(images, mean, std, out_dtype=jnp.bfloat16):
    """images: [B, C, H, W]; mean/std: [C].  Returns two [B, C, H, W] views."""
    B, C, H, W = images.shape
    R, HW = B * C, H * W
    x2d = images.reshape(R, HW)                      # contiguous reshape, native dtype

    # Fold normalize + per-view affine into per-channel (a, b), then expand to
    # a tiny per-row [R, 4] coefficient table ([a0, b0, a1, b1] per row).
    mean_f = mean.astype(jnp.float32)
    inv_std = 1.0 / std.astype(jnp.float32)
    a0 = VIEW0_SCALE * inv_std
    b0 = VIEW0_SHIFT - mean_f * a0
    a1 = VIEW1_SCALE * inv_std
    b1 = VIEW1_SHIFT - mean_f * a1
    coef = jnp.tile(jnp.stack([a0, b0, a1, b1], axis=1), (B, 1))   # [R, 4] f32

    block_budget, vmem_limit = _vmem_budgets()
    BB, LT = _choose_tiles(R, HW, images.dtype, jnp.dtype(out_dtype), block_budget)
    grid = (pl.cdiv(R, BB), pl.cdiv(HW, LT))

    img_spec = pl.BlockSpec((BB, LT), lambda i, j: (i, j))
    coef_spec = pl.BlockSpec((BB, 4), lambda i, j: (i, 0))

    out_itemsize = jnp.dtype(out_dtype).itemsize
    cost = pl.CostEstimate(
        flops=4 * R * HW,
        transcendentals=0,
        bytes_accessed=R * HW * (images.dtype.itemsize + 2 * out_itemsize) + 4 * R * 4,
    )

    out0, out1 = pl.pallas_call(
        _collate_kernel,
        out_shape=(
            jax.ShapeDtypeStruct((R, HW), out_dtype),
            jax.ShapeDtypeStruct((R, HW), out_dtype),
        ),
        grid_spec=pltpu.PrefetchScalarGridSpec(
            num_scalar_prefetch=0,
            grid=grid,
            in_specs=[img_spec, coef_spec],
            out_specs=(img_spec, img_spec),
        ),
        compiler_params=pltpu.CompilerParams(
            dimension_semantics=("parallel", "parallel"),
            vmem_limit_bytes=vmem_limit,
        ),
        cost_estimate=cost,
    )(x2d, coef)

    return out0.reshape(B, C, H, W), out1.reshape(B, C, H, W)


class BaseCollateFunction:
    """JAX/Pallas port of the PyTorch BaseCollateFunction.

    `transform` is replaced by deterministic per-channel normalization
    parameters (mean, std) + a per-view affine applied inside the kernel.
    """

    def __init__(self, mean, std, out_dtype=jnp.bfloat16):
        self.mean = jnp.asarray(mean, dtype=jnp.float32)
        self.std = jnp.asarray(std, dtype=jnp.float32)
        self.out_dtype = jnp.dtype(out_dtype)

    def __call__(self, batch):
        """batch: list of (image[C,H,W], label, filename) tuples.

        Returns ((img_t0, img_t1), labels, fnames): two transformed views of
        the batch ([B,C,H,W] each), labels=None, filenames passed through.
        """
        images = jnp.stack([item[0] for item in batch], axis=0)  # [B,C,H,W]
        fnames = [item[2] for item in batch]
        labels = None
        img_t0, img_t1 = _two_view_transform(
            images, self.mean, self.std, out_dtype=self.out_dtype
        )
        return (img_t0, img_t1), labels, fnames


if __name__ == "__main__":
    key = jax.random.PRNGKey(0)
    B, C, H, W = 2, 4, 16, 16
    imgs = jax.random.uniform(key, (B, C, H, W), dtype=jnp.float32)

    # Deterministic per-channel "transform" parameters.
    mean = jnp.linspace(0.4, 0.6, C, dtype=jnp.float32)
    std = jnp.linspace(0.2, 0.3, C, dtype=jnp.float32)

    batch = [(imgs[i], 0, f"img_{i}.png") for i in range(B)]

    # Plain-JAX reference.
    xn = (imgs - mean.reshape(1, C, 1, 1)) / std.reshape(1, C, 1, 1)
    ref0 = xn * VIEW0_SCALE + VIEW0_SHIFT
    ref1 = xn * VIEW1_SCALE + VIEW1_SHIFT

    # f32 output path: tight reference check.
    collate_f32 = BaseCollateFunction(mean, std, out_dtype=jnp.float32)
    (t0, t1), labels, fnames = collate_f32(batch)
    jax.block_until_ready((t0, t1))
    assert t0.shape == (B, C, H, W) and t1.shape == (B, C, H, W)
    assert jnp.allclose(t0, ref0, atol=1e-5)
    assert jnp.allclose(t1, ref1, atol=1e-5)
    assert labels is None
    assert fnames == [f"img_{i}.png" for i in range(B)]

    # Default bf16 output path (the bandwidth-optimal configuration).
    collate_bf16 = BaseCollateFunction(mean, std)   # out_dtype defaults to bf16
    (u0, u1), _, _ = collate_bf16(batch)
    jax.block_until_ready((u0, u1))
    assert u0.dtype == jnp.bfloat16 and u1.dtype == jnp.bfloat16
    assert jnp.allclose(u0.astype(jnp.float32), ref0, atol=3e-2)
    assert jnp.allclose(u1.astype(jnp.float32), ref1, atol=3e-2)

    print("KERNEL_OK")
</pallas_src>

<mosaic_0001>
module attributes {stable_mosaic.version = 11 : i64} {
  func.func @_collate_kernel(%arg0: i32, %arg1: i32, %arg2: memref<8x256xf32, #tpu.memory_space<vmem>>, %arg3: memref<8x4xf32, #tpu.memory_space<vmem>>, %arg4: memref<8x256xf32, #tpu.memory_space<vmem>>, %arg5: memref<8x256xf32, #tpu.memory_space<vmem>>) attributes {dimension_semantics = [#tpu.dimension_semantics<parallel>, #tpu.dimension_semantics<parallel>], iteration_bounds = array<i64: 1, 1>, scalar_prefetch = 0 : i64, scratch_operands = 0 : i64, tpu.core_type = #tpu.core_type<tc>, window_params = [{transform_indices = @transform_0, window_bounds = array<i64: 8, 256>}, {transform_indices = @transform_1, window_bounds = array<i64: 8, 4>}, {transform_indices = @transform_2, window_bounds = array<i64: 8, 256>}, {transform_indices = @transform_3, window_bounds = array<i64: 8, 256>}]} {
    %c0 = arith.constant 0 : index
    %c0_0 = arith.constant 0 : index
    %0 = vector.load %arg2[%c0, %c0_0] : memref<8x256xf32, #tpu.memory_space<vmem>>, vector<8x256xf32>
    %c0_1 = arith.constant 0 : index
    %c0_2 = arith.constant 0 : index
    %1 = vector.load %arg3[%c0_1, %c0_2] : memref<8x4xf32, #tpu.memory_space<vmem>>, vector<8x4xf32>
    %2 = vector.extract_strided_slice %1 {offsets = [0, 0], sizes = [8, 1], strides = [1, 1]} : vector<8x4xf32> to vector<8x1xf32>
    %3 = vector.broadcast %2 : vector<8x1xf32> to vector<8x256xf32>
    %4 = arith.mulf %0, %3 : vector<8x256xf32>
    %5 = vector.extract_strided_slice %1 {offsets = [0, 1], sizes = [8, 1], strides = [1, 1]} : vector<8x4xf32> to vector<8x1xf32>
    %6 = vector.broadcast %5 : vector<8x1xf32> to vector<8x256xf32>
    %7 = arith.addf %4, %6 : vector<8x256xf32>
    %c0_3 = arith.constant 0 : index
    %c0_4 = arith.constant 0 : index
    %8 = vector.load %arg4[%c0_3, %c0_4] : memref<8x256xf32, #tpu.memory_space<vmem>>, vector<8x256xf32>
    tpu.vector_store %arg4[%c0_3, %c0_4], %7 {strides = array<i32>} : memref<8x256xf32, #tpu.memory_space<vmem>>, vector<8x256xf32>,
    %9 = vector.extract_strided_slice %1 {offsets = [0, 2], sizes = [8, 1], strides = [1, 1]} : vector<8x4xf32> to vector<8x1xf32>
    %10 = vector.broadcast %9 : vector<8x1xf32> to vector<8x256xf32>
    %11 = arith.mulf %0, %10 : vector<8x256xf32>
    %12 = vector.extract_strided_slice %1 {offsets = [0, 3], sizes = [8, 1], strides = [1, 1]} : vector<8x4xf32> to vector<8x1xf32>
    %13 = vector.broadcast %12 : vector<8x1xf32> to vector<8x256xf32>
    %14 = arith.addf %11, %13 : vector<8x256xf32>
    %c0_5 = arith.constant 0 : index
    %c0_6 = arith.constant 0 : index
    %15 = vector.load %arg5[%c0_5, %c0_6] : memref<8x256xf32, #tpu.memory_space<vmem>>, vector<8x256xf32>
    tpu.vector_store %arg5[%c0_5, %c0_6], %14 {strides = array<i32>} : memref<8x256xf32, #tpu.memory_space<vmem>>, vector<8x256xf32>,
    return
  }
  func.func @transform_0(%arg0: i32, %arg1: i32) -> (i32, i32) {
    %c0_i32 = arith.constant 0 : i32
    return %arg0, %arg1 : i32, i32
  }
  func.func @transform_1(%arg0: i32, %arg1: i32) -> (i32, i32) {
    %c0_i32 = arith.constant 0 : i32
    %c0_i32_0 = arith.constant 0 : i32
    return %arg0, %c0_i32 : i32, i32
  }
  func.func @transform_2(%arg0: i32, %arg1: i32) -> (i32, i32) {
    %c0_i32 = arith.constant 0 : i32
    return %arg0, %arg1 : i32, i32
  }
  func.func @transform_3(%arg0: i32, %arg1: i32) -> (i32, i32) {
    %c0_i32 = arith.constant 0 : i32
    return %arg0, %arg1 : i32, i32
  }
}

</mosaic_0001>

<llo_original>
// kernel: _two_view_transform.1
$region0: #{_two_view_transform.1}
  #allocation0 [shape = 'u32[]', space=smem, size = 0x4, offset = 0x4, fixed_abs, tag = 'smem constant byte address 0x4 - core index']
  #allocation1 [shape = 'u32[144,128]{1,0:T(1,128)}', space=vmem, size = 0x12000, scoped, tag = 'internal scratch']
  %s0 = inlined_call_operand.vmem [shape: f32[8,256], index: 0, kind: input, shape index: {}]
  %s1 = inlined_call_operand.vmem [shape: f32[8,4], index: 1, kind: input, shape index: {}]
  %s2 = inlined_call_operand.vmem [shape: f32[8,256], index: 2, kind: output, shape index: {0}]
  %s3 = inlined_call_operand.vmem [shape: f32[8,256], index: 3, kind: output, shape index: {1}]
  %4 = xla_tuple %s2, %s3
  %s5 = sld [smem:[#allocation0]]
  $region26: #{_two_view_transform.1} parent=0
    _
  %s7 = ssub.s32 1, %s5
  %s8 = scalar_select 0, %s7, %s5
  // Predicated region
  $region2: #{_two_view_transform.1} parent=0 // pred_check
    _
  $region3: #{_two_view_transform.1} parent=0 // pred_check_branch
    %10 = sbr.rel (0) target = $region5
  $region4: #{_two_view_transform.1} parent=0 // pred_region
    _
  $region5: #{_two_view_transform.1} parent=0 // pred_fallthru
    _
  // Predicated region
  $region6: #{_two_view_transform.1} parent=0 // pred_check
    _
  $region7: #{_two_view_transform.1} parent=0 // pred_check_branch
    %12 = sbr.rel (0) target = $region9
  $region8: #{_two_view_transform.1} parent=0 // pred_region
    _
  $region9: #{_two_view_transform.1} parent=0 // pred_fallthru
    _
  %v13 = vld [vmem:[%s0] sm:$0xff]
  %v14 = vld [vmem:[%s0 + $0x8] sm:$0xff]
  %v15 = vld [vmem:[%s1] sm:$0xff]
  %17 = vset.pattern.permute.xlu0 0
  %18 = vperm.xlu0 %17, %v15
  %v19 = vpop.permute.xlu0 %18
  %v21 = vmul.f32 %v13, %v19
  %v22 = vmul.f32 %v14, %v19
  %23 = vset.pattern.permute.xlu0 1
  %24 = vperm.xlu0 %23, %v15
  %v25 = vpop.permute.xlu0 %24
  %v27 = vadd.f32 %v21, %v25
  %v28 = vadd.f32 %v22, %v25
  %29 = vst [vmem:[%s2] sm:$0xff] %v27
  %30 = vst [vmem:[%s2 + $0x8] sm:$0xff] %v28
  %31 = vset.pattern.permute.xlu0 2
  %32 = vperm.xlu0 %31, %v15
  %v33 = vpop.permute.xlu0 %32
  %v35 = vmul.f32 %v13, %v33
  %v36 = vmul.f32 %v14, %v33
  %37 = vset.pattern.permute.xlu0 3
  %38 = vperm.xlu0 %37, %v15
  %v39 = vpop.permute.xlu0 %38
  %v41 = vadd.f32 %v35, %v39
  %v42 = vadd.f32 %v36, %v39
  %43 = vst [vmem:[%s3] sm:$0xff] %v41
  %44 = vst [vmem:[%s3 + $0x8] sm:$0xff] %v42
  // Predicated region
  $region10: #{_two_view_transform.1} parent=0 // pred_check
    _
  $region11: #{_two_view_transform.1} parent=0 // pred_check_branch
    %46 = sbr.rel (0) target = $region13
  $region12: #{_two_view_transform.1} parent=0 // pred_region
    _
  $region13: #{_two_view_transform.1} parent=0 // pred_fallthru
    _
  // Predicated region
  $region14: #{_two_view_transform.1} parent=0 // pred_check
    _
  $region15: #{_two_view_transform.1} parent=0 // pred_check_branch
    %48 = sbr.rel (0) target = $region17
  $region16: #{_two_view_transform.1} parent=0 // pred_region
    _
  $region17: #{_two_view_transform.1} parent=0 // pred_fallthru
    _
  // Predicated region
  $region18: #{_two_view_transform.1} parent=0 // pred_check
    _
  $region19: #{_two_view_transform.1} parent=0 // pred_check_branch
    %50 = sbr.rel (0) target = $region21
  $region20: #{_two_view_transform.1} parent=0 // pred_region
    _
  $region21: #{_two_view_transform.1} parent=0 // pred_fallthru
    _
  // Predicated region
  $region22: #{_two_view_transform.1} parent=0 // pred_check
    _
  $region23: #{_two_view_transform.1} parent=0 // pred_check_branch
    %52 = sbr.rel (0) target = $region25
  $region24: #{_two_view_transform.1} parent=0 // pred_region
    _
  $region25: #{_two_view_transform.1} parent=0 // pred_fallthru
    _

</llo_original>
